<compile_context>
chip_gen: v5e
topology: v5e:2x2
jax: 0.10.0
libtpu: 0.0.40
codegen_flags: <defaults>
</compile_context>

<pallas_src>
import functools
import math

import jax
import jax.numpy as jnp
from jax.experimental import pallas as pl
from jax.experimental.pallas import tpu as pltpu


# ----------------------------------------------------------------------------
# Per-generation VMEM budget (96 MiB on 128 MiB parts, 48 MiB on v7x's 64 MiB).
# ----------------------------------------------------------------------------
@functools.lru_cache(maxsize=None)
def _vmem_limit_bytes():
    cap = 128 * 1024 * 1024
    try:
        info = pltpu.get_tpu_info()
        cap = int(getattr(info, "vmem_capacity_bytes", cap))
    except Exception:
        pass
    return int(cap * 3 // 4)


def _pick_tile(n, cap, multiple):
    """Largest divisor of n that is <= cap and a multiple of `multiple`
    (falls back to the full extent if none exists)."""
    if n <= cap:
        return n
    for t in range(cap, 0, -1):
        if n % t == 0 and t % multiple == 0:
            return t
    return n


def _pick_batch_tile(b, nt, d, stacked, vmem_limit):
    """How many samples share one resident copy of a layer's weights.

    Budget: double-buffered layer weights + ~16 sequence-sized f32 temporaries
    (scores / fc1 activations of the in-flight sample) + ~10 sequence-sized
    buffers per batched sample (carry + double-buffered in/out blocks)."""
    w_bytes = sum(math.prod(w.shape[1:]) * jnp.dtype(w.dtype).itemsize
                  for w in stacked)
    seq_bytes = nt * d * 4
    budget = vmem_limit - 2 * w_bytes - 16 * seq_bytes
    cap = 1 if budget <= 0 else max(1, budget // (10 * seq_bytes))
    cap = int(min(cap, 8, b))
    bt = 1
    for t in range(1, cap + 1):
        if b % t == 0:
            bt = t
    return bt


# ----------------------------------------------------------------------------
# GELU: PyTorch nn.GELU() default is the exact erf-based GELU.  Probe once
# (cached, warmed in __main__ outside the forward path) whether lax.erf lowers
# on this Pallas/Mosaic build, otherwise fall back to the tanh approximation.
# TODO(synk): the tanh form routes through the EUP (separate VLIW slot) and can
# be preferable as a perf knob if the VALU slot saturates; erf is kept when
# available for closer PyTorch parity.
# ----------------------------------------------------------------------------
@functools.lru_cache(maxsize=None)
def _erf_in_pallas_ok():
    def k(x_ref, o_ref):
        o_ref[...] = jax.lax.erf(x_ref[...])
    try:
        f = pl.pallas_call(k, out_shape=jax.ShapeDtypeStruct((8, 128), jnp.float32))
        jax.block_until_ready(f(jnp.zeros((8, 128), jnp.float32)))
        return True
    except Exception:
        return False


def _gelu(x, exact):
    if exact:
        return 0.5 * x * (1.0 + jax.lax.erf(x * (1.0 / math.sqrt(2.0))))
    c = math.sqrt(2.0 / math.pi)
    return 0.5 * x * (1.0 + jnp.tanh(c * (x + 0.044715 * x * x * x)))


def _layernorm(z, w, b, eps=1e-6):
    m = jnp.mean(z, axis=-1, keepdims=True)
    v = jnp.mean(jnp.square(z - m), axis=-1, keepdims=True)
    return (z - m) * jax.lax.rsqrt(v + eps) * w + b


# ----------------------------------------------------------------------------
# Pallas kernels
# ----------------------------------------------------------------------------
def _patch_embed_kernel(x_ref, w_ref, b_ref, o_ref):
    # x block: (TM, C*P*P) bf16, w: (C*P*P, D) bf16, b: (1, D) f32
    o_ref[...] = (jnp.dot(x_ref[...], w_ref[...],
                          preferred_element_type=jnp.float32) + b_ref[...])


def _encoder_stack_kernel(*refs, num_heads, head_dim, batch_tile, exact_gelu,
                          capture_layer, fused_init):
    # grid = (batch // Bt, layer); layer axis is "arbitrary" (sequential carry).
    if fused_init:
        tok_ref, wmask_ref, cls_ref, mt_ref, pe_ref = refs[:5]
        refs = refs[5:]
    else:
        x_ref = refs[0]
        refs = refs[1:]
    (ln1w, ln1b, wqkv, bqkv, wproj, bproj, g1,
     ln2w, ln2b, wfc1, bfc1, wfc2, bfc2, g2) = refs[:14]
    refs = refs[14:]
    if capture_layer is not None:
        out_ref, early_ref, carry = refs
    else:
        out_ref, carry = refs

    il = pl.program_id(1)
    dm = carry.shape[-1]

    @pl.when(il == 0)
    def _init():
        if fused_init:
            # Build the initial sequence in VMEM: [cls+pos | masked patches+pos]
            tok = tok_ref[...]                                   # (Bt, n, D)
            wm = wmask_ref[...]                                  # (Bt, n, 1)
            pe = pe_ref[...]                                     # (1, nt, D)
            cls_row = jnp.broadcast_to(cls_ref[...] + pe[:, 0:1, :],
                                       (batch_tile, 1, dm))
            patch_rows = tok * (1.0 - wm) + mt_ref[...] * wm + pe[:, 1:, :]
            carry[:, 0:1, :] = cls_row
            carry[:, 1:, :] = patch_rows
        else:
            carry[...] = x_ref[...]

    # Layer weights (VMEM-resident for the whole batch tile).
    w_ln1, b_ln1 = ln1w[0], ln1b[0]
    w_qkv, b_qkv = wqkv[0], bqkv[0]
    w_pr, b_pr = wproj[0], bproj[0]
    gm1 = g1[0]
    w_ln2, b_ln2 = ln2w[0], ln2b[0]
    w_f1, b_f1 = wfc1[0], bfc1[0]
    w_f2, b_f2 = wfc2[0], bfc2[0]
    gm2 = g2[0]

    def split_heads(t, start):
        # (N, 3D) bf16 -> (H, N, hd) bf16: per-head lane slices stacked along a
        # new leading axis.
        # TODO(synk): Mosaic does not reliably lower non-minor 3D transposes, so
        # the split stays a slice/stack (XLU work that overlaps with the MXU).
        return jnp.concatenate(
            [jnp.expand_dims(
                t[:, start + hh * head_dim:start + (hh + 1) * head_dim], 0)
             for hh in range(num_heads)], axis=0)

    for ib in range(batch_tile):
        xi = carry[ib]                                           # (nt, D) f32

        # --- attention branch ---
        h = _layernorm(xi, w_ln1, b_ln1)
        qkv = (jnp.dot(h.astype(jnp.bfloat16), w_qkv,
                       preferred_element_type=jnp.float32) + b_qkv)  # (N, 3D)
        qkv = qkv.astype(jnp.bfloat16)   # q already scaled (folded into wqkv)
        qh = split_heads(qkv, 0)
        kh = split_heads(qkv, dm)
        vh = split_heads(qkv, 2 * dm)

        s = jax.lax.dot_general(qh, kh, (((2,), (2,)), ((0,), (0,))),
                                preferred_element_type=jnp.float32)  # (H, N, N)
        s = s - jnp.max(s, axis=-1, keepdims=True)
        p = jnp.exp(s)
        p = p * pl.reciprocal(jnp.sum(p, axis=-1, keepdims=True), approx=True)
        o = jax.lax.dot_general(p.astype(jnp.bfloat16), vh,
                                (((2,), (1,)), ((0,), (0,))),
                                preferred_element_type=jnp.float32)  # (H, N, hd)
        o = o.astype(jnp.bfloat16)

        # Head merge folded into the output projection: sum_h o_h @ Wp[h*hd:(h+1)*hd]
        ctx = jnp.dot(o[0], w_pr[0:head_dim, :],
                      preferred_element_type=jnp.float32)
        for hh in range(1, num_heads):
            ctx = ctx + jnp.dot(
                o[hh], w_pr[hh * head_dim:(hh + 1) * head_dim, :],
                preferred_element_type=jnp.float32)
        xi = xi + gm1 * (ctx + b_pr)

        # --- MLP branch ---
        h2 = _layernorm(xi, w_ln2, b_ln2)
        h2 = (jnp.dot(h2.astype(jnp.bfloat16), w_f1,
                      preferred_element_type=jnp.float32) + b_f1)
        h2 = _gelu(h2, exact_gelu)
        h2 = (jnp.dot(h2.astype(jnp.bfloat16), w_f2,
                      preferred_element_type=jnp.float32) + b_f2)
        xi = xi + gm2 * h2

        carry[ib] = xi

    if capture_layer is not None:
        @pl.when(il == capture_layer)
        def _capture():
            early_ref[...] = carry[...]   # hidden state tapped after early_layers

    @pl.when(il == pl.num_programs(1) - 1)
    def _finalize():
        out_ref[...] = carry[...]


def _norm_head_kernel(x_ref, nw, nb, wlm, blm, o_ref, h_bf16):
    # LayerNorm + bf16 cast computed once per row tile (at vocab tile j == 0)
    # and reused for every vocab tile.
    @pl.when(pl.program_id(1) == 0)
    def _():
        h_bf16[...] = _layernorm(x_ref[...], nw[...], nb[...]).astype(jnp.bfloat16)
    o_ref[...] = (jnp.dot(h_bf16[...], wlm[...],
                          preferred_element_type=jnp.float32) + blm[...])


# ----------------------------------------------------------------------------
# Wrappers
# ----------------------------------------------------------------------------
def patch_embed_apply(patches_bf16, w, b, *, row_tile=512):
    bn, kk = patches_bf16.shape
    d = w.shape[1]
    tm = _pick_tile(bn, row_tile, 8)
    return pl.pallas_call(
        _patch_embed_kernel,
        out_shape=jax.ShapeDtypeStruct((bn, d), jnp.float32),
        grid=(bn // tm,),
        in_specs=[pl.BlockSpec((tm, kk), lambda i: (i, 0)),
                  pl.BlockSpec((kk, d), lambda i: (0, 0)),
                  pl.BlockSpec((1, d), lambda i: (0, 0))],
        out_specs=pl.BlockSpec((tm, d), lambda i: (i, 0)),
        compiler_params=pltpu.CompilerParams(
            dimension_semantics=("parallel",),
            vmem_limit_bytes=_vmem_limit_bytes()),
    )(patches_bf16, w, b)


def encoder_stack_apply(inputs, stacked, num_heads, exact_gelu, capture_layer,
                        fused_init):
    """Run a stack of ViT encoder blocks in a single pallas_call.

    inputs:
      fused_init=True : (tokens (b,n,d) f32, wmask (b,n,1) f32, cls (1,1,d),
                         mask_token (1,1,d), pos_embed (1,n+1,d))
      fused_init=False: (seq (b,nt,d) f32,)
    """
    if fused_init:
        tokens = inputs[0]
        b, n, d = tokens.shape
        nt = n + 1
    else:
        b, nt, d = inputs[0].shape
    num_layers = stacked[0].shape[0]
    head_dim = d // num_heads
    vlimit = _vmem_limit_bytes()
    bt = _pick_batch_tile(b, nt, d, stacked, vlimit)

    kernel = functools.partial(
        _encoder_stack_kernel, num_heads=num_heads, head_dim=head_dim,
        batch_tile=bt, exact_gelu=exact_gelu, capture_layer=capture_layer,
        fused_init=fused_init)

    def layer_spec(w):
        nd = w.ndim
        return pl.BlockSpec((1,) + tuple(w.shape[1:]),
                            lambda ib, il, _nd=nd: (il,) + (0,) * (_nd - 1))

    if fused_init:
        seq_in_specs = [
            pl.BlockSpec((bt, n, d), lambda ib, il: (ib, 0, 0)),   # patch tokens
            pl.BlockSpec((bt, n, 1), lambda ib, il: (ib, 0, 0)),   # mask weights
            pl.BlockSpec((1, 1, d), lambda ib, il: (0, 0, 0)),     # cls token
            pl.BlockSpec((1, 1, d), lambda ib, il: (0, 0, 0)),     # mask token
            pl.BlockSpec((1, nt, d), lambda ib, il: (0, 0, 0)),    # pos embed
        ]
    else:
        seq_in_specs = [pl.BlockSpec((bt, nt, d), lambda ib, il: (ib, 0, 0))]

    out_spec = pl.BlockSpec((bt, nt, d), lambda ib, il: (ib, 0, 0))
    if capture_layer is not None:
        out_shape = (jax.ShapeDtypeStruct((b, nt, d), jnp.float32),
                     jax.ShapeDtypeStruct((b, nt, d), jnp.float32))
        out_specs = (out_spec, out_spec)
    else:
        out_shape = jax.ShapeDtypeStruct((b, nt, d), jnp.float32)
        out_specs = out_spec

    return pl.pallas_call(
        kernel,
        out_shape=out_shape,
        grid=(b // bt, num_layers),
        in_specs=seq_in_specs + [layer_spec(w) for w in stacked],
        out_specs=out_specs,
        scratch_shapes=[pltpu.VMEM((bt, nt, d), jnp.float32)],
        compiler_params=pltpu.CompilerParams(
            dimension_semantics=("parallel", "arbitrary"),
            vmem_limit_bytes=vlimit),
    )(*inputs, *stacked)


def norm_head_apply(x2d, nw, nb, wlm, blm, *, row_tile=1024, vocab_tile=1024):
    r, d = x2d.shape
    v = wlm.shape[1]
    tr = _pick_tile(r, row_tile, 8)
    tv = _pick_tile(v, vocab_tile, 128)
    return pl.pallas_call(
        _norm_head_kernel,
        out_shape=jax.ShapeDtypeStruct((r, v), jnp.float32),
        grid=(r // tr, v // tv),
        in_specs=[pl.BlockSpec((tr, d), lambda i, j: (i, 0)),
                  pl.BlockSpec((1, d), lambda i, j: (0, 0)),
                  pl.BlockSpec((1, d), lambda i, j: (0, 0)),
                  pl.BlockSpec((d, tv), lambda i, j: (0, j)),
                  pl.BlockSpec((1, tv), lambda i, j: (0, j))],
        out_specs=pl.BlockSpec((tr, tv), lambda i, j: (i, j)),
        scratch_shapes=[pltpu.VMEM((tr, d), jnp.bfloat16)],
        compiler_params=pltpu.CompilerParams(
            dimension_semantics=("parallel", "arbitrary"),
            vmem_limit_bytes=_vmem_limit_bytes()),
    )(x2d, nw, nb, wlm, blm)


# ----------------------------------------------------------------------------
# Parameter init (deterministic, mirrors BeitV2.__init__ shapes & rescales).
# Matmul weights are stored pre-transposed (y = x @ W + b) and cast to bf16
# once; biases / LN params / layerscale gammas stay f32.  The 1/sqrt(head_dim)
# query scale is folded into the q columns of the qkv weight.
# ----------------------------------------------------------------------------
def _trunc_normal(key, shape, std):
    # matches specific_trunc_normal_: N(0, std) truncated to [-std, std]
    return std * jax.random.truncated_normal(key, -1.0, 1.0, shape, jnp.float32)


def init_params(key, cfg):
    d = cfg["embed_dim"]
    c = cfg["in_chans"]
    p = cfg["patch_size"]
    v = cfg["vocab_size"]
    dh = int(d * cfg["mlp_ratio"])
    n = (cfg["img_size"] // p) ** 2
    depth, head_layers = cfg["depth"], cfg["head_layers"]
    head_dim = d // cfg["num_heads"]
    q_scale = head_dim ** -0.5
    std = 0.02
    keys = iter(jax.random.split(key, 8 * (depth + head_layers) + 8))
    tn = lambda shape: _trunc_normal(next(keys), shape, std)

    def make_block(layer_id):
        wqkv = tn((3 * d, d)).T                                     # (D, 3D)
        wqkv = wqkv.at[:, :d].multiply(q_scale).astype(jnp.bfloat16)
        # TODO(synk): for real checkpoints qkv bias is [q_bias * q_scale, 0, v_bias];
        # a weight-loading path must assemble the (1, 3D) bias accordingly.
        bqkv = jnp.zeros((1, 3 * d), jnp.float32)
        wproj = (tn((d, d)) / math.sqrt(2.0 * layer_id)).T.astype(jnp.bfloat16)
        bproj = jnp.zeros((1, d), jnp.float32)
        wfc1 = tn((dh, d)).T.astype(jnp.bfloat16)
        bfc1 = jnp.zeros((1, dh), jnp.float32)
        wfc2 = (tn((d, dh)) / math.sqrt(2.0 * layer_id)).T.astype(jnp.bfloat16)
        bfc2 = jnp.zeros((1, d), jnp.float32)
        ln1w = jnp.ones((1, d), jnp.float32)
        ln1b = jnp.zeros((1, d), jnp.float32)
        ln2w = jnp.ones((1, d), jnp.float32)
        ln2b = jnp.zeros((1, d), jnp.float32)
        g1 = cfg["init_values"] * jnp.ones((1, d), jnp.float32)
        g2 = cfg["init_values"] * jnp.ones((1, d), jnp.float32)
        return (ln1w, ln1b, wqkv, bqkv, wproj, bproj, g1,
                ln2w, ln2b, wfc1, bfc1, wfc2, bfc2, g2)

    def stack_blocks(blocks):
        return tuple(jnp.stack([blk[i] for blk in blocks], axis=0)
                     for i in range(len(blocks[0])))

    params = {}
    conv_w = tn((d, c, p, p))                                       # Conv2d weight
    params["patch_w"] = conv_w.reshape(d, c * p * p).T.astype(jnp.bfloat16)
    params["patch_b"] = jnp.zeros((1, d), jnp.float32)
    params["cls_token"] = tn((1, 1, d))
    params["mask_token"] = tn((1, 1, d))
    params["pos_embed"] = tn((1, n + 1, d))
    params["blocks"] = stack_blocks([make_block(i + 1) for i in range(depth)])
    params["cls_pt_blocks"] = stack_blocks(
        [make_block(cfg["early_layers"] + j + 1) for j in range(head_layers)])
    params["norm_w"] = jnp.ones((1, d), jnp.float32)
    params["norm_b"] = jnp.zeros((1, d), jnp.float32)
    params["lm_w"] = tn((v, d)).T.astype(jnp.bfloat16)              # (D, V)
    params["lm_b"] = jnp.zeros((1, v), jnp.float32)
    return params


# ----------------------------------------------------------------------------
# BeitV2 forward (equivalent to forward(x, bool_masked_pos, return_all_tokens=True))
# TODO(synk): the module's default return path `lm_head(x[bool_masked_pos])` is a
# boolean gather with a data-dependent output shape; not expressible in JAX/Pallas,
# so the return_all_tokens=True branch is implemented instead.
# ----------------------------------------------------------------------------
def beitv2_forward(params, x, cfg, bool_masked_pos=None):
    b, c, h_img, w_img = x.shape
    p = cfg["patch_size"]
    hp, wp = h_img // p, w_img // p
    n = hp * wp
    d = cfg["embed_dim"]
    v = params["lm_b"].shape[1]
    exact_gelu = _erf_in_pallas_ok()   # lru-cached; warmed outside forward

    # patch extraction (NCHW -> (B*N, C*P*P), matching Conv2d weight layout),
    # cast to bf16 so the patch-embed kernel streams half the input bytes.
    patches = (x.reshape(b, c, hp, p, wp, p)
                .transpose(0, 2, 4, 1, 3, 5)
                .reshape(b * n, c * p * p)).astype(jnp.bfloat16)
    tokens = patch_embed_apply(patches, params["patch_w"], params["patch_b"])
    tokens = tokens.reshape(b, n, d)

    if bool_masked_pos is None:
        bool_masked_pos = jnp.zeros((b, n), dtype=bool)
    wmask = bool_masked_pos[..., None].astype(jnp.float32)

    # main encoder: all blocks in one pallas_call (batch-tile x layer grid);
    # mask-token mixing, cls concat and pos_embed add are fused into the
    # layer-0 init; the hidden state after `early_layers` blocks is tapped.
    seq, early = encoder_stack_apply(
        (tokens, wmask, params["cls_token"], params["mask_token"],
         params["pos_embed"]),
        params["blocks"], cfg["num_heads"], exact_gelu,
        capture_layer=cfg["early_layers"] - 1, fused_init=True)

    seq_cls_pt = jnp.concatenate([seq[:, :1], early[:, 1:]], axis=1)
    seq_cls_pt = encoder_stack_apply(
        (seq_cls_pt,), params["cls_pt_blocks"], cfg["num_heads"], exact_gelu,
        capture_layer=None, fused_init=False)

    # final LayerNorm is per-token so it commutes with dropping the cls token;
    # both branches are merged into one row/vocab-tiled norm+lm_head pass so
    # the lm weight is streamed from HBM once.
    merged = jnp.concatenate([seq[:, 1:], seq_cls_pt[:, 1:]], axis=0)
    flat = merged.reshape(2 * b * n, d)
    logits = norm_head_apply(flat, params["norm_w"], params["norm_b"],
                             params["lm_w"], params["lm_b"])
    logits = logits.reshape(2 * b, n, v)
    return [logits[:b], logits[b:]]


if __name__ == "__main__":
    cfg = dict(img_size=16, patch_size=4, in_chans=4, vocab_size=64,
               embed_dim=32, depth=2, num_heads=4, mlp_ratio=4.0,
               early_layers=1, head_layers=1, init_values=0.1)

    _ = _erf_in_pallas_ok()     # warm the GELU probe outside the forward path
    _ = _vmem_limit_bytes()     # warm the hardware query

    key = jax.random.PRNGKey(0)
    kp, kx, km = jax.random.split(key, 3)
    params = init_params(kp, cfg)
    x = jax.random.normal(kx, (2, cfg["in_chans"], cfg["img_size"], cfg["img_size"]),
                          jnp.float32)
    num_patches = (cfg["img_size"] // cfg["patch_size"]) ** 2
    bool_masked_pos = jax.random.bernoulli(km, 0.3, (2, num_patches))

    outs = beitv2_forward(params, x, cfg, bool_masked_pos=bool_masked_pos)
    jax.block_until_ready(outs)
    assert outs[0].shape == (2, num_patches, cfg["vocab_size"])
    assert outs[1].shape == (2, num_patches, cfg["vocab_size"])
    print("KERNEL_OK")
</pallas_src>

<mosaic_0001>
module attributes {stable_mosaic.version = 11 : i64} {
  func.func @k(%arg0: memref<8x128xf32, #tpu.memory_space<vmem>>, %arg1: memref<8x128xf32, #tpu.memory_space<vmem>>) attributes {dimension_semantics = [], scalar_prefetch = 0 : i64, scratch_operands = 0 : i64, tpu.core_type = #tpu.core_type<tc>} {
    %c0 = arith.constant 0 : index
    %c0_0 = arith.constant 0 : index
    %0 = vector.load %arg0[%c0, %c0_0] : memref<8x128xf32, #tpu.memory_space<vmem>>, vector<8x128xf32>
    %1 = math.erf %0 : vector<8x128xf32>
    %c0_1 = arith.constant 0 : index
    %c0_2 = arith.constant 0 : index
    %2 = vector.load %arg1[%c0_1, %c0_2] : memref<8x128xf32, #tpu.memory_space<vmem>>, vector<8x128xf32>
    tpu.vector_store %arg1[%c0_1, %c0_2], %1 {strides = array<i32>} : memref<8x128xf32, #tpu.memory_space<vmem>>, vector<8x128xf32>,
    return
  }
}

module attributes {stable_mosaic.version = 11 : i64} {
  func.func @_patch_embed_kernel(%arg0: i32, %arg1: memref<32x64xbf16, #tpu.memory_space<vmem>>, %arg2: memref<64x32xbf16, #tpu.memory_space<vmem>>, %arg3: memref<1x32xf32, #tpu.memory_space<vmem>>, %arg4: memref<32x32xf32, #tpu.memory_space<vmem>>) attributes {dimension_semantics = [#tpu.dimension_semantics<parallel>], iteration_bounds = array<i64: 1>, scalar_prefetch = 0 : i64, scratch_operands = 0 : i64, tpu.core_type = #tpu.core_type<tc>, window_params = [{transform_indices = @transform_0, window_bounds = array<i64: 32, 64>}, {pipeline_mode = #tpu.pipeline_mode<synchronous>, transform_indices = @transform_1, window_bounds = array<i64: 64, 32>}, {pipeline_mode = #tpu.pipeline_mode<synchronous>, transform_indices = @transform_2, window_bounds = array<i64: 1, 32>}, {transform_indices = @transform_3, window_bounds = array<i64: 32, 32>}]} {
    %c0 = arith.constant 0 : index
    %c0_0 = arith.constant 0 : index
    %0 = vector.load %arg1[%c0, %c0_0] : memref<32x64xbf16, #tpu.memory_space<vmem>>, vector<32x64xbf16>
    %c0_1 = arith.constant 0 : index
    %c0_2 = arith.constant 0 : index
    %1 = vector.load %arg2[%c0_1, %c0_2] : memref<64x32xbf16, #tpu.memory_space<vmem>>, vector<64x32xbf16>
    %cst = arith.constant dense<0.000000e+00> : vector<32x32xf32>
    %2 = tpu.matmul %0, %1, %cst {dimension_numbers = #tpu.dot_dimension_numbers<[1], [0], [0], [1], [0, 0, 1, 1], [], []>} : vector<32x64xbf16>, vector<64x32xbf16>, vector<32x32xf32> -> vector<32x32xf32>
    %c0_3 = arith.constant 0 : index
    %c0_4 = arith.constant 0 : index
    %3 = vector.load %arg3[%c0_3, %c0_4] : memref<1x32xf32, #tpu.memory_space<vmem>>, vector<1x32xf32>
    %4 = vector.broadcast %3 : vector<1x32xf32> to vector<32x32xf32>
    %5 = arith.addf %2, %4 : vector<32x32xf32>
    %c0_5 = arith.constant 0 : index
    %c0_6 = arith.constant 0 : index
    %6 = vector.load %arg4[%c0_5, %c0_6] : memref<32x32xf32, #tpu.memory_space<vmem>>, vector<32x32xf32>
    tpu.vector_store %arg4[%c0_5, %c0_6], %5 {strides = array<i32>} : memref<32x32xf32, #tpu.memory_space<vmem>>, vector<32x32xf32>,
    return
  }
  func.func @transform_0(%arg0: i32) -> (i32, i32) {
    %c0_i32 = arith.constant 0 : i32
    %c0_i32_0 = arith.constant 0 : i32
    return %arg0, %c0_i32 : i32, i32
  }
  func.func @transform_1(%arg0: i32) -> (i32, i32) {
    %c0_i32 = arith.constant 0 : i32
    %c0_i32_0 = arith.constant 0 : i32
    %c0_i32_1 = arith.constant 0 : i32
    return %c0_i32, %c0_i32_0 : i32, i32
  }
  func.func @transform_2(%arg0: i32) -> (i32, i32) {
    %c0_i32 = arith.constant 0 : i32
    %c0_i32_0 = arith.constant 0 : i32
    %c0_i32_1 = arith.constant 0 : i32
    return %c0_i32, %c0_i32_0 : i32, i32
  }
  func.func @transform_3(%arg0: i32) -> (i32, i32) {
    %c0_i32 = arith.constant 0 : i32
    %c0_i32_0 = arith.constant 0 : i32
    return %arg0, %c0_i32 : i32, i32
  }
}

</mosaic_0001>

<llo_original>
// kernel: tpu_custom_call.1
$region0: #{tpu_custom_call.1}
  #allocation0 [shape = 'u32[]', space=smem, size = 0x4, offset = 0x4, fixed_abs, tag = 'smem constant byte address 0x4 - core index']
  #allocation1 [shape = 'u32[72,128]{1,0:T(1,128)}', space=vmem, size = 0x9000, scoped, tag = 'internal scratch']
  %s0 = inlined_call_operand.hbm [shape: f32[8,128], index: 0, kind: input, shape index: {}]
  %s1 = inlined_call_operand.hbm [shape: f32[8,128], index: 1, kind: output, shape index: {}]
  %s2 = sld [smem:[#allocation0]]
  $region18: #{tpu_custom_call.1} parent=0
    _
  %s4 = ssub.s32 1, %s2
  %s5 = scalar_select 0, %s4, %s2
  $region1: #{tpu_custom_call.1} parent=0
    #allocation2 [shape = 'u8[4096]{0}', space=vmem, size = 0x1000, scoped, tag = 'input window, operand 0, single buffered']
    #allocation3 [shape = 's32[1]{0}', space=sflag, size = 0x4, scoped, tag = 'scoped memory for tpu_custom_call.1']
    #allocation4 [shape = 's32[1]{0}', space=sflag, size = 0x4, scoped, tag = 'scoped memory for tpu_custom_call.1']
    #allocation5 [shape = 'u8[4096]{0}', space=vmem, size = 0x1000, scoped, tag = 'output window, operand 0, single buffered']
    %6 = vsyncpa [#allocation3], 0
    %7 = vsyncpa [#allocation4], 0
    // Predicated region
    $region2: #{tpu_custom_call.1} parent=1 // pred_check
      _
    $region3: #{tpu_custom_call.1} parent=1 // pred_check_branch
      %9 = sbr.rel (0) target = $region5
    $region4: #{tpu_custom_call.1} parent=1 // pred_region
      %11 = vsyncadd [#allocation3], 0
      %s13 = sshll.u32 %s0, 4
      %s14 = int_to_ptr.hbm [resolvable:$true] %s13
      %s15 = sshll.u32 [#allocation2], 4
      %s16 = int_to_ptr.vmem [resolvable:$true] %s15
      %18 = dma.hbm_to_vmem [thread:$0]  %s14, 128, %s16, [#allocation3]
    $region5: #{tpu_custom_call.1} parent=1 // pred_fallthru
      _
    // Predicated region
    $region6: #{tpu_custom_call.1} parent=1 // pred_check
      _
    $region7: #{tpu_custom_call.1} parent=1 // pred_check_branch
      %20 = sbr.rel (0) target = $region9
    $region8: #{tpu_custom_call.1} parent=1 // pred_region
      %22 = dma.done [#allocation3], 128
    $region9: #{tpu_custom_call.1} parent=1 // pred_fallthru
      _
    %v23 = vld [vmem:[#allocation2] sm:$0xff]
    %v24 = vmul.f32 %v23, %v23
    %v25 = vmin.f32 16.0, %v24
    %v26 = vmul.f32 %v25, 2.1237322e-06
    %v27 = vadd.f32 %v26, 0.00028619796
    %v28 = vmul.f32 %v25, %v27
    %v29 = vadd.f32 %v28, 0.0036580483
    %v30 = vmul.f32 %v25, %v29
    %v31 = vadd.f32 %v30, 0.05243302
    %v32 = vmul.f32 %v25, %v31
    %v33 = vadd.f32 %v32, 0.18741608
    %v34 = vmul.f32 %v25, %v33
    %v35 = vadd.f32 %v34, 1.1283791
    %v36 = vmul.f32 %v23, %v35
    %v37 = vmul.f32 %v25, 3.8918573e-05
    %v38 = vadd.f32 %v37, 0.001143296
    %v39 = vmul.f32 %v25, %v38
    %v40 = vadd.f32 %v39, 0.014752088
    %v41 = vmul.f32 %v25, %v40
    %v42 = vadd.f32 %v41, 0.112945676
    %v43 = vmul.f32 %v25, %v42
    %v44 = vadd.f32 %v43, 0.4994258
    %v45 = vmul.f32 %v25, %v44
    %v46 = vadd.f32 %v45, 1.0
    %v47 = vrcp.pop %v46
    %v48 = vmul.f32 %v46, %v47
    %v49 = vsub.f32 1.0, %v48
    %v50 = vmul.f32 %v47, %v49
    %v51 = vadd.f32 %v47, %v50
    %vm52 = vweird.f32 %v46
    %vm53 = vweird.f32 %v47
    %vm54 = vmor %vm52, %vm53
    %v55 = vsel %vm54, %v47, %v51
    %v56 = vand.u32 2147483647, %v46
    %vm57 = vcmp.eq.f32.partialorder %v56, 8.507059e+37
    %v58 = vand.u32 %v46, 2147483648
    %v59 = vor.u32 1.1754944e-38, %v58
    %v60 = vsel %vm57, %v59, %v55
    %v61 = vmul.f32 %v36, %v60
    %v62 = vmin.f32 %v61, 1.0
    %v63 = vmax.f32 %v62, -1.0
    %64 = vst [vmem:[#allocation5] sm:$0xff] %v63
    // Predicated region
    $region10: #{tpu_custom_call.1} parent=1 // pred_check
      _
    $region11: #{tpu_custom_call.1} parent=1 // pred_check_branch
      %66 = sbr.rel (0) target = $region13
    $region12: #{tpu_custom_call.1} parent=1 // pred_region
      %68 = vsyncadd [#allocation4], 0
      %s70 = sshll.u32 [#allocation5], 4
      %s71 = int_to_ptr.vmem [resolvable:$true] %s70
      %s72 = sshll.u32 %s1, 4
      %s73 = int_to_ptr.hbm [resolvable:$true] %s72
      %75 = dma.vmem_to_hbm [thread:$0]  %s71, 128, %s73, [#allocation4]
    $region13: #{tpu_custom_call.1} parent=1 // pred_fallthru
      _
    // Predicated region
    $region14: #{tpu_custom_call.1} parent=1 // pred_check
      _
    $region15: #{tpu_custom_call.1} parent=1 // pred_check_branch
      %77 = sbr.rel (0) target = $region17
    $region16: #{tpu_custom_call.1} parent=1 // pred_region
      %79 = dma.done [#allocation4], 128
    $region17: #{tpu_custom_call.1} parent=1 // pred_fallthru
      _
    %80 = vsyncpa [#allocation3], 1
    %81 = vsyncpa [#allocation4], 1

// kernel: tpu_custom_call.1
$region0: #{tpu_custom_call.1}
  #allocation0 [shape = 'u32[]', space=smem, size = 0x4, offset = 0x4, fixed_abs, tag = 'smem constant byte address 0x4 - core index']
  #allocation1 [shape = 'u32[72,128]{1,0:T(1,128)}', space=vmem, size = 0x9000, scoped, tag = 'internal scratch']
  %s0 = inlined_call_operand.vmem [shape: bf16[32,64], index: 0, kind: input, shape index: {}]
  %s1 = inlined_call_operand.vmem [shape: bf16[64,32], index: 1, kind: input, shape index: {}]
  %s2 = inlined_call_operand.vmem [shape: f32[1,32], index: 2, kind: input, shape index: {}]
  %s3 = inlined_call_operand.hbm [shape: f32[32,32], index: 3, kind: output, shape index: {}]
  %s4 = sld [smem:[#allocation0]]
  $region22: #{tpu_custom_call.1} parent=0
    _
  %s6 = ssub.s32 1, %s4
  %s7 = scalar_select 0, %s6, %s4
  $region1: #{tpu_custom_call.1} parent=0
    #allocation2 [shape = 'u8[16384]{0}', space=vmem, size = 0x4000, scoped, tag = 'output window, operand 0, single buffered']
    #allocation3 [shape = 's32[1]{0}', space=sflag, size = 0x4, scoped, tag = 'scoped memory for tpu_custom_call.1']
    %8 = vsyncpa [#allocation3], 0
    // Predicated region
    $region2: #{tpu_custom_call.1} parent=1 // pred_check
      _
    $region3: #{tpu_custom_call.1} parent=1 // pred_check_branch
      %10 = sbr.rel (0) target = $region5
    $region4: #{tpu_custom_call.1} parent=1 // pred_region
      _
    $region5: #{tpu_custom_call.1} parent=1 // pred_fallthru
      _
    // Predicated region
    $region6: #{tpu_custom_call.1} parent=1 // pred_check
      _
    $region7: #{tpu_custom_call.1} parent=1 // pred_check_branch
      %12 = sbr.rel (0) target = $region9
    $region8: #{tpu_custom_call.1} parent=1 // pred_region
      _
    $region9: #{tpu_custom_call.1} parent=1 // pred_fallthru
      _
    // Predicated region
    $region10: #{tpu_custom_call.1} parent=1 // pred_check
      _
    $region11: #{tpu_custom_call.1} parent=1 // pred_check_branch
      %14 = sbr.rel (0) target = $region13
    $region12: #{tpu_custom_call.1} parent=1 // pred_region
      _
    $region13: #{tpu_custom_call.1} parent=1 // pred_fallthru
      _
    %v16 = vld [vmem:[%s0] sm:$0xf]
    %v17 = vld [vmem:[%s0 + $0x4] sm:$0xf]
    %v18 = vld [vmem:[%s0 + $0x8] sm:$0xf]
    %v19 = vld [vmem:[%s0 + $0xc] sm:$0xf]
    %v20 = vld [vmem:[%s1] sm:$0xf]
    %v21 = vld [vmem:[%s1 + $0x4] sm:$0xf]
    %v22 = vld [vmem:[%s1 + $0x8] sm:$0xf]
    %v23 = vld [vmem:[%s1 + $0xc] sm:$0xf]
    %v24 = vld [vmem:[%s1 + $0x10] sm:$0xf]
    %v25 = vld [vmem:[%s1 + $0x14] sm:$0xf]
    %v26 = vld [vmem:[%s1 + $0x18] sm:$0xf]
    %v27 = vld [vmem:[%s1 + $0x1c] sm:$0xf]
    %v28 = vld [vmem:[%s2] sm:$0x1]
    %v30 = vperm.slane %v28, 0
    %v36 = vunpack.c.l.b16 %v16
    %v37 = vunpack.c.l.b16 %v17
    %v38 = vunpack.c.l.b16 %v18
    %v39 = vunpack.c.l.b16 %v19
    %v40 = vpack.c.b16 %v37, %v36
    %v41 = vpack.c.b16 %v39, %v38
    %v50 = vunpack.c.l.b16 %v20
    %v51 = vunpack.c.l.b16 %v21
    %v52 = vunpack.c.l.b16 %v22
    %v53 = vunpack.c.l.b16 %v23
    %v54 = vunpack.c.l.b16 %v24
    %v55 = vunpack.c.l.b16 %v25
    %v56 = vunpack.c.l.b16 %v26
    %v57 = vunpack.c.l.b16 %v27
    %v58 = vpack.c.b16 %v51, %v50
    %v59 = vpack.c.b16 %v53, %v52
    %v60 = vpack.c.b16 %v55, %v54
    %v61 = vpack.c.b16 %v57, %v56
    %vm66 = vcmask 523264
    %v68 = vsel %vm66, %v40, 0
    %v71 = vsel %vm66, %v41, 0
    %73 = vmatpush.bf16.msra.mxu0 0
    %74 = vmatpush.bf16.msra.mxu0 0
    %75 = vmatpush.bf16.msra.mxu0 0
    %76 = vmatpush.bf16.msra.mxu0 0
    %77 = vmatpush.bf16.msra.mxu0 %v61
    %78 = vmatpush.bf16.msra.mxu0 %v60
    %79 = vmatpush.bf16.msra.mxu0 %v59
    %80 = vmatpush.bf16.msra.mxu0 %v58
    %81 = vmatmul.bf16.gmra.mxu0 %v68
    %v82 = vpop.f32.mrf.mxu0
    %v83 = vadd.f32 %v30, %v82
    %v84 = vpop.f32.mrf.mxu0
    %v85 = vadd.f32 %v30, %v84
    %86 = vmatmul.bf16.gmra.mxu0 %v71
    %v87 = vpop.f32.mrf.mxu0
    %v88 = vadd.f32 %v30, %v87
    %v89 = vpop.f32.mrf.mxu0
    %v90 = vadd.f32 %v30, %v89
    %91 = vdwg.mxu0
    %vm92 = vcmask 261120
    %93 = vst.msk [vmem:[#allocation2] sm:$0xff] %vm92, %v83
    %94 = vst.msk [vmem:[#allocation2 + $0x8] sm:$0xff] %vm92, %v85
    %95 = vst.msk [vmem:[#allocation2 + $0x10] sm:$0xff] %vm92, %v88
    %96 = vst.msk [vmem:[#allocation2 + $0x18] sm:$0xff] %vm92, %v90
    // Predicated region
    $region14: #{tpu_custom_call.1} parent=1 // pred_check
      _
    $region15: #{tpu_custom_call.1} parent=1 // pred_check_branch
      %98 = sbr.rel (0) target = $region17
    $region16: #{tpu_custom_call.1} parent=1 // pred_region
      %100 = vsyncadd [#allocation3], 0
      %s101 = sshll.u32 [#allocation2], 4
      %s102 = int_to_ptr.vmem [resolvable:$true] %s101
      %s103 = sshll.u32 %s3, 4
      %s104 = int_to_ptr.hbm [resolvable:$true] %s103
      %109 = dma.vmem_to_hbm [thread:$0]  %s102, 512, %s104, [#allocation3], 128, 128, 8
    $region17: #{tpu_custom_call.1} parent=1 // pred_fallthru
      _
    // Predicated region
    $region18: #{tpu_custom_call.1} parent=1 // pred_check
      _
    $region19: #{tpu_custom_call.1} parent=1 // pred_check_branch
      %111 = sbr.rel (0) target = $region21
    $region20: #{tpu_custom_call.1} parent=1 // pred_region
      %113 = dma.done [#allocation3], 512
    $region21: #{tpu_custom_call.1} parent=1 // pred_fallthru
      _
    %114 = vsyncpa [#allocation3], 1

</llo_original>
